<compile_context>
chip_gen: v6e
topology: v6e:2x2x1
jax: 0.10.0
libtpu: 0.0.40
codegen_flags: <defaults>
</compile_context>

<pallas_src>
import jax
import jax.numpy as jnp
from jax.experimental import pallas as pl
from jax.experimental.pallas import tpu as pltpu

# Module constants (from specTr.py)
MEAN = [0.485, 0.456, 0.406]
STD = [0.229, 0.224, 0.225]

_MIB = 1024 * 1024


def _norm_kernel(x_ref, inv_ref, shift_ref, o_ref):
    # x_ref / o_ref: (br, bc) VMEM tiles of the flattened (N*C, H*W) image.
    # inv_ref / shift_ref: (br, 1) f32 per-row 1/std and -mean/std (lane-broadcast).
    xf = x_ref[...].astype(jnp.float32)
    o_ref[...] = (xf * inv_ref[...] + shift_ref[...]).astype(o_ref.dtype)


def _round_up(x, m):
    return (x + m - 1) // m * m


def _vmem_budget():
    """Return (per-block byte budget, scoped VMEM limit) sized from physical VMEM."""
    vmem_cap = 128 * _MIB  # v5e / v6e default
    try:
        info = pltpu.get_tpu_info()
        vmem_cap = int(getattr(info, "vmem_capacity_bytes", vmem_cap))
    except Exception:
        pass
    # Scoped limit: half of physical VMEM, clamped to [32, 64] MiB
    # -> 64 MiB on 128-MiB v5e/v6e, 32 MiB on 64-MiB-per-TC v7x.
    vmem_limit = int(min(max(vmem_cap // 2, 32 * _MIB), 64 * _MIB))
    # Double-buffered input + output = 4 live blocks; keep 2x headroom for scratch.
    block_bytes = vmem_limit // 8  # 8 MiB (v5e/v6e) or 4 MiB (v7x) per block
    return block_bytes, vmem_limit


def custom_normalization(x, mean, std, *, max_block_bytes=None, vmem_limit_bytes=None):
    """x: (N, C, H, W); mean/std: (C,). Returns (x - mean[c]) / std[c] per channel."""
    N, C, H, W = x.shape
    NC, HW = N * C, H * W
    itemsize = jnp.dtype(x.dtype).itemsize

    auto_block, auto_limit = _vmem_budget()
    if max_block_bytes is None:
        max_block_bytes = auto_block
    if vmem_limit_bytes is None:
        vmem_limit_bytes = auto_limit

    # Lane-dense 2D layout: rows index (n, c), cols index flattened spatial.
    xf = x.reshape(NC, HW)

    # Per-row constants in f32 (cast only the output); fold (x - mean)/std into a
    # single multiply-add: x * inv_std + shift, with shift = -mean * inv_std.
    mean_f = jnp.asarray(mean, dtype=jnp.float32)
    inv_f = 1.0 / jnp.asarray(std, dtype=jnp.float32)
    shift_f = -mean_f * inv_f
    inv_rows = jnp.tile(inv_f, N).reshape(NC, 1)
    shift_rows = jnp.tile(shift_f, N).reshape(NC, 1)

    # dtype-aware native tile: (8,128) f32, (16,128) bf16/f16, (32,128) int8/fp8.
    sub_unit = max(8, 32 // itemsize)
    lane_unit = 128
    budget_elems = max(sub_unit * lane_unit, max_block_bytes // itemsize)

    # Column block: largest 128-multiple within the per-sublane-unit budget; if the
    # whole spatial extent fits, take the full dim (always a legal block dim).
    bc_cap = max(lane_unit, (budget_elems // sub_unit) // lane_unit * lane_unit)
    bc = min(_round_up(HW, lane_unit), bc_cap)
    if bc >= HW:
        bc = HW

    # Row block: fill the remaining byte budget (no hard row cap), multiple of the
    # sublane unit; full dim if everything fits.
    br_cap = max(sub_unit, (budget_elems // max(bc, 1)) // sub_unit * sub_unit)
    br = min(_round_up(NC, sub_unit), br_cap)
    if br >= NC:
        br = NC

    # cdiv grid: only the tail block in each axis is masked, block size stays bounded.
    grid = (pl.cdiv(NC, br), pl.cdiv(HW, bc))

    flops = 2 * NC * HW                      # one mul + one add per element
    bytes_accessed = 2 * NC * HW * itemsize  # read x + write out (constants negligible)

    out = pl.pallas_call(
        _norm_kernel,
        out_shape=jax.ShapeDtypeStruct((NC, HW), x.dtype),
        grid=grid,
        in_specs=[
            pl.BlockSpec((br, bc), lambda i, j: (i, j)),
            pl.BlockSpec((br, 1), lambda i, j: (i, 0)),
            pl.BlockSpec((br, 1), lambda i, j: (i, 0)),
        ],
        out_specs=pl.BlockSpec((br, bc), lambda i, j: (i, j)),
        compiler_params=pltpu.CompilerParams(
            # Pure elementwise: both axes independent, so v7x megacore can shard
            # whichever axis has >1 step (switch axis 0 to pltpu.CORE_PARALLEL only
            # if profiling shows one TensorCore idle).
            dimension_semantics=("parallel", "parallel"),
            vmem_limit_bytes=vmem_limit_bytes,
        ),
        cost_estimate=pl.CostEstimate(
            flops=flops, transcendentals=0, bytes_accessed=bytes_accessed
        ),
    )(xf, inv_rows, shift_rows)

    return out.reshape(N, C, H, W)


if __name__ == "__main__":
    key = jax.random.PRNGKey(0)
    N, C, H, W = 2, 3, 16, 16  # C=3 matches the module's mean/std
    x = jax.random.normal(key, (N, C, H, W), dtype=jnp.float32)

    mean = jnp.asarray(MEAN, dtype=jnp.float32)
    std = jnp.asarray(STD, dtype=jnp.float32)

    out = jax.block_until_ready(custom_normalization(x, mean, std))

    # Reference in plain JAX (mirrors PyTorch (1, C, 1, 1) broadcasting)
    ref = (x - mean.reshape(1, C, 1, 1)) / std.reshape(1, C, 1, 1)
    assert jnp.allclose(out, ref, atol=1e-5, rtol=1e-5), "mismatch vs reference"

    print("KERNEL_OK")
</pallas_src>

<mosaic_0001>
module attributes {stable_mosaic.version = 11 : i64} {
  func.func @_norm_kernel(%arg0: i32, %arg1: i32, %arg2: memref<6x256xf32, #tpu.memory_space<vmem>>, %arg3: memref<6x1xf32, #tpu.memory_space<vmem>>, %arg4: memref<6x1xf32, #tpu.memory_space<vmem>>, %arg5: memref<6x256xf32, #tpu.memory_space<vmem>>) attributes {dimension_semantics = [#tpu.dimension_semantics<parallel>, #tpu.dimension_semantics<parallel>], iteration_bounds = array<i64: 1, 1>, scalar_prefetch = 0 : i64, scratch_operands = 0 : i64, tpu.core_type = #tpu.core_type<tc>, window_params = [{transform_indices = @transform_0, window_bounds = array<i64: 6, 256>}, {transform_indices = @transform_1, window_bounds = array<i64: 6, 1>}, {transform_indices = @transform_2, window_bounds = array<i64: 6, 1>}, {transform_indices = @transform_3, window_bounds = array<i64: 6, 256>}]} {
    %c0 = arith.constant 0 : index
    %c0_0 = arith.constant 0 : index
    %0 = vector.load %arg2[%c0, %c0_0] : memref<6x256xf32, #tpu.memory_space<vmem>>, vector<6x256xf32>
    %c0_1 = arith.constant 0 : index
    %c0_2 = arith.constant 0 : index
    %1 = vector.load %arg3[%c0_1, %c0_2] : memref<6x1xf32, #tpu.memory_space<vmem>>, vector<6x1xf32>
    %2 = vector.broadcast %1 : vector<6x1xf32> to vector<6x256xf32>
    %3 = arith.mulf %0, %2 : vector<6x256xf32>
    %c0_3 = arith.constant 0 : index
    %c0_4 = arith.constant 0 : index
    %4 = vector.load %arg4[%c0_3, %c0_4] : memref<6x1xf32, #tpu.memory_space<vmem>>, vector<6x1xf32>
    %5 = vector.broadcast %4 : vector<6x1xf32> to vector<6x256xf32>
    %6 = arith.addf %3, %5 : vector<6x256xf32>
    %c0_5 = arith.constant 0 : index
    %c0_6 = arith.constant 0 : index
    %7 = vector.load %arg5[%c0_5, %c0_6] : memref<6x256xf32, #tpu.memory_space<vmem>>, vector<6x256xf32>
    tpu.vector_store %arg5[%c0_5, %c0_6], %6 {strides = array<i32>} : memref<6x256xf32, #tpu.memory_space<vmem>>, vector<6x256xf32>,
    return
  }
  func.func @transform_0(%arg0: i32, %arg1: i32) -> (i32, i32) {
    %c0_i32 = arith.constant 0 : i32
    return %arg0, %arg1 : i32, i32
  }
  func.func @transform_1(%arg0: i32, %arg1: i32) -> (i32, i32) {
    %c0_i32 = arith.constant 0 : i32
    %c0_i32_0 = arith.constant 0 : i32
    return %arg0, %c0_i32 : i32, i32
  }
  func.func @transform_2(%arg0: i32, %arg1: i32) -> (i32, i32) {
    %c0_i32 = arith.constant 0 : i32
    %c0_i32_0 = arith.constant 0 : i32
    return %arg0, %c0_i32 : i32, i32
  }
  func.func @transform_3(%arg0: i32, %arg1: i32) -> (i32, i32) {
    %c0_i32 = arith.constant 0 : i32
    return %arg0, %arg1 : i32, i32
  }
}

</mosaic_0001>

<llo_original>
// kernel: tpu_custom_call.1
$region0: #{tpu_custom_call.1}
  #allocation0 [shape = 'u32[]', space=smem, size = 0x4, offset = 0x4, fixed_abs, tag = 'smem constant byte address 0x4 - core index']
  #allocation1 [shape = 'u32[144,128]{1,0:T(1,128)}', space=vmem, size = 0x12000, scoped, tag = 'internal scratch']
  %s0 = inlined_call_operand.vmem [shape: f32[6,256], index: 0, kind: input, shape index: {}]
  %s1 = inlined_call_operand.vmem [shape: f32[6,1], index: 1, kind: input, shape index: {}]
  %s2 = inlined_call_operand.vmem [shape: f32[6,1], index: 2, kind: input, shape index: {}]
  %s3 = inlined_call_operand.hbm [shape: f32[6,256], index: 3, kind: output, shape index: {}]
  %s4 = sld [smem:[#allocation0]]
  $region22: #{tpu_custom_call.1} parent=0
    _
  %s6 = ssub.s32 1, %s4
  %s7 = scalar_select 0, %s6, %s4
  $region1: #{tpu_custom_call.1} parent=0
    #allocation2 [shape = 'u8[8192]{0}', space=vmem, size = 0x2000, scoped, tag = 'output window, operand 0, single buffered']
    #allocation3 [shape = 's32[1]{0}', space=sflag, size = 0x4, scoped, tag = 'scoped memory for tpu_custom_call.1']
    %8 = vsyncpa [#allocation3], 0
    // Predicated region
    $region2: #{tpu_custom_call.1} parent=1 // pred_check
      _
    $region3: #{tpu_custom_call.1} parent=1 // pred_check_branch
      %10 = sbr.rel (0) target = $region5
    $region4: #{tpu_custom_call.1} parent=1 // pred_region
      _
    $region5: #{tpu_custom_call.1} parent=1 // pred_fallthru
      _
    // Predicated region
    $region6: #{tpu_custom_call.1} parent=1 // pred_check
      _
    $region7: #{tpu_custom_call.1} parent=1 // pred_check_branch
      %12 = sbr.rel (0) target = $region9
    $region8: #{tpu_custom_call.1} parent=1 // pred_region
      _
    $region9: #{tpu_custom_call.1} parent=1 // pred_fallthru
      _
    // Predicated region
    $region10: #{tpu_custom_call.1} parent=1 // pred_check
      _
    $region11: #{tpu_custom_call.1} parent=1 // pred_check_branch
      %14 = sbr.rel (0) target = $region13
    $region12: #{tpu_custom_call.1} parent=1 // pred_region
      _
    $region13: #{tpu_custom_call.1} parent=1 // pred_fallthru
      _
    %v15 = vld [vmem:[%s0] sm:$0x3f]
    %v16 = vld [vmem:[%s0 + $0x8] sm:$0x3f]
    %v17 = vld [vmem:[%s1] sm:$0x3f]
    %19 = vset.pattern.permute.xlu0 0
    %20 = vperm.xlu0 %19, %v17
    %v21 = vpop.permute.xlu0 %20
    %v23 = vmul.f32 %v15, %v21
    %v24 = vmul.f32 %v16, %v21
    %v25 = vld [vmem:[%s2] sm:$0x3f]
    %27 = vset.pattern.permute.xlu0 0
    %28 = vperm.xlu0 %27, %v25
    %v29 = vpop.permute.xlu0 %28
    %v31 = vadd.f32 %v23, %v29
    %v32 = vadd.f32 %v24, %v29
    %33 = vst [vmem:[#allocation2] sm:$0x3f] %v31
    %34 = vst [vmem:[#allocation2 + $0x8] sm:$0x3f] %v32
    // Predicated region
    $region14: #{tpu_custom_call.1} parent=1 // pred_check
      _
    $region15: #{tpu_custom_call.1} parent=1 // pred_check_branch
      %36 = sbr.rel (0) target = $region17
    $region16: #{tpu_custom_call.1} parent=1 // pred_region
      %s38 = ssub.s32 256, 256
      %39 = vsyncadd [#allocation3], %s38
      %s41 = sshll.u32 [#allocation2], 4
      %s42 = int_to_ptr.vmem [resolvable:$true] %s41
      %44 = dma.vmem_to_hbm [thread:$0]  %s42, 256, %s3, [#allocation3]
    $region17: #{tpu_custom_call.1} parent=1 // pred_fallthru
      _
    // Predicated region
    $region18: #{tpu_custom_call.1} parent=1 // pred_check
      _
    $region19: #{tpu_custom_call.1} parent=1 // pred_check_branch
      %46 = sbr.rel (0) target = $region21
    $region20: #{tpu_custom_call.1} parent=1 // pred_region
      %47 = dma.done [#allocation3], 256
    $region21: #{tpu_custom_call.1} parent=1 // pred_fallthru
      _
    %48 = vsyncpa [#allocation3], 1

</llo_original>
